<compile_context>
chip_gen: v5e
topology: v5e:2x2
jax: 0.10.0
libtpu: 0.0.40
codegen_flags: <defaults>
</compile_context>

<pallas_src>
from functools import partial

import jax
import jax.numpy as jnp
from jax.experimental import pallas as pl
from jax.experimental.pallas import tpu as pltpu


# ---------------------------------------------------------------------------
# Kernel
# ---------------------------------------------------------------------------
def lstm_classifier_kernel(D, H, CP, x_ref, w_ref, b_ref, out_ref):
    """Fused forward pass on one batch tile. All operands resident in VMEM.

    Weight blob (bf16) rows:
      [0        , D        )  LSTM L0 (embedding folded in)  (D , 6H)
                              cols = [i_f i_b | g_f g_b | o_f o_b]
      [D        , D+2H     )  LSTM L1                        (2H, 6H)  same cols
      [D+2H     , D+4H     )  classifier1                    (2H, 128) cols [0:128)
      [D+4H     , D+4H+128 )  classifier2                    (128, CP) cols [0:CP)
    Bias blob (f32) rows 0..3 hold b0', b1, bc1, bc2 (same column layouts).
    """
    H2 = 2 * H
    r_w1 = D
    r_wc1 = D + H2
    r_wc2 = D + 2 * H2
    r_end = r_wc2 + 128

    def bilstm_step(inp_bf16, w, b):
        # gate cols: [i_f|i_b | g_f|g_b | o_f|o_b]; each i/g/o block is 2H
        # (= 128) lanes wide, so all elementwise math runs on full vregs and
        # the result h is already [h_fwd | h_bwd] (PyTorch hidden-cat order).
        gates = jnp.dot(inp_bf16, w, preferred_element_type=jnp.float32) + b
        i = jax.nn.sigmoid(gates[:, 0:H2])
        g = jnp.tanh(gates[:, H2:2 * H2])
        o = jax.nn.sigmoid(gates[:, 2 * H2:3 * H2])
        return o * jnp.tanh(i * g)              # c = i*g because c0 == 0 (f32)

    # ---- layer 0 (embedding Linear folded into the gate weights) ----
    h_l0 = bilstm_step(x_ref[...], w_ref[0:r_w1, :], b_ref[0:1, :])       # (TB, 2H)

    # ---- layer 1 ----
    hidden_cat = bilstm_step(h_l0.astype(jnp.bfloat16),
                             w_ref[r_w1:r_wc1, :], b_ref[1:2, :])         # (TB, 2H)

    # ---- classifier: Linear(2H, 128-padded) -> ReLU -> Dropout(id) -> Linear ----
    z = (jnp.dot(hidden_cat.astype(jnp.bfloat16), w_ref[r_wc1:r_wc2, 0:128],
                 preferred_element_type=jnp.float32)
         + b_ref[2:3, 0:128])
    z = jnp.maximum(z, 0.0)
    out_ref[...] = (jnp.dot(z.astype(jnp.bfloat16), w_ref[r_wc2:r_end, 0:CP],
                            preferred_element_type=jnp.float32)
                    + b_ref[3:4, 0:CP])                                   # (TB, CP)


# ---------------------------------------------------------------------------
# Wrapper
# ---------------------------------------------------------------------------
@partial(jax.jit, static_argnames=("D", "H", "C", "CP"))
def lstm_classifier_forward(x, wblob, bblob, *, D, H, C, CP=128):
    assert C <= CP, f"num_classes {C} must be <= padded class dim {CP}"
    B = x.shape[0]
    BP8 = max(8, -(-B // 8) * 8)                    # batch padded to sublane multiple
    TB = 256 if BP8 >= 256 else BP8                 # batch tile (multiple of 8)
    BP = -(-BP8 // TB) * TB
    x_p = jnp.pad(x.astype(jnp.bfloat16), ((0, BP - B), (0, 0)))

    flops = 2 * BP * (D * 6 * H + 2 * H * 6 * H + 2 * H * 128 + 128 * CP)
    transcendentals = BP * 16 * H
    bytes_accessed = 2 * (x_p.size + wblob.size) + 4 * (bblob.size + BP * CP)

    out = pl.pallas_call(
        partial(lstm_classifier_kernel, D, H, CP),
        out_shape=jax.ShapeDtypeStruct((BP, CP), jnp.float32),
        grid=(BP // TB,),
        in_specs=[pl.BlockSpec((TB, D), lambda i: (i, 0)),
                  pl.BlockSpec(wblob.shape, lambda i: (0, 0)),   # weights stay resident
                  pl.BlockSpec(bblob.shape, lambda i: (0, 0))],
        out_specs=pl.BlockSpec((TB, CP), lambda i: (i, 0)),
        compiler_params=pltpu.CompilerParams(dimension_semantics=("parallel",)),
        cost_estimate=pl.CostEstimate(flops=flops,
                                      transcendentals=transcendentals,
                                      bytes_accessed=bytes_accessed),
    )(x_p, wblob, bblob)
    return out[:B, :C]


# ---------------------------------------------------------------------------
# Host-side parameter construction / repacking
# ---------------------------------------------------------------------------
def init_torch_style_params(key, D, H, C):
    """PyTorch-layout parameters (same init distribution as nn.Linear / nn.LSTM)."""
    def uni(k, shape, fan_in):
        bound = 1.0 / (fan_in ** 0.5)
        return jax.random.uniform(k, shape, jnp.float32, -bound, bound)

    ks = iter(jax.random.split(key, 32))
    p = {}
    p["emb_w"] = uni(next(ks), (H, D), D)           # Linear weight (out, in)
    p["emb_b"] = uni(next(ks), (H,), D)
    for layer, in_dim in ((0, H), (1, 2 * H)):      # bidirectional -> layer1 in = 2H
        for d in ("fwd", "bwd"):
            # weight_hh is not materialized: h0 == 0 so W_hh @ h0 == 0; only
            # b_hh contributes and is folded into the packed bias below.
            p[f"w_ih_l{layer}_{d}"] = uni(next(ks), (4 * H, in_dim), H)  # rows i,f,g,o
            p[f"b_ih_l{layer}_{d}"] = uni(next(ks), (4 * H,), H)
            p[f"b_hh_l{layer}_{d}"] = uni(next(ks), (4 * H,), H)
    p["cls1_w"] = uni(next(ks), (64, 2 * H), 2 * H)
    p["cls1_b"] = uni(next(ks), (64,), 2 * H)
    p["cls2_w"] = uni(next(ks), (C, 64), 64)
    p["cls2_b"] = uni(next(ks), (C,), 64)
    return p


def pack_params(p, D, H, C, CP=128):
    """Repack PyTorch-layout params into one bf16 weight blob + one f32 bias blob.

    PyTorch LSTM gate row order is (i, f, g, o); the f-gate is dropped because
    c0 == 0, and per-layer columns are interleaved as [i_f i_b g_f g_b o_f o_b].
    The embedding Linear is folded exactly into the layer-0 gate matmul.
    """
    assert D % 8 == 0 and 2 * H % 128 == 0, "use lane-friendly D/H"
    assert C <= CP, f"num_classes {C} must be <= padded class dim {CP}"
    WCOL = 6 * H
    assert WCOL >= CP and WCOL >= 128

    def gate_w(layer):
        def split(w):                     # (4H, in) -> transposed i, g, o blocks
            wt = w.T                      # (in, 4H)
            return wt[:, 0:H], wt[:, 2 * H:3 * H], wt[:, 3 * H:4 * H]
        i_f, g_f, o_f = split(p[f"w_ih_l{layer}_fwd"])
        i_b, g_b, o_b = split(p[f"w_ih_l{layer}_bwd"])
        return jnp.concatenate([i_f, i_b, g_f, g_b, o_f, o_b], axis=1)   # (in, 6H)

    def gate_b(layer):
        def split(b):
            return b[0:H], b[2 * H:3 * H], b[3 * H:4 * H]
        i_f, g_f, o_f = split(p[f"b_ih_l{layer}_fwd"] + p[f"b_hh_l{layer}_fwd"])
        i_b, g_b, o_b = split(p[f"b_ih_l{layer}_bwd"] + p[f"b_hh_l{layer}_bwd"])
        return jnp.concatenate([i_f, i_b, g_f, g_b, o_f, o_b])           # (6H,)

    # Fold embedding Linear (no nonlinearity in between -> exact) in f32.
    w0_gates = gate_w(0)                                         # (H, 6H)
    w0 = p["emb_w"].T @ w0_gates                                 # (D, 6H)
    b0 = p["emb_b"] @ w0_gates + gate_b(0)                       # (6H,)

    w1 = gate_w(1)                                               # (2H, 6H)
    b1 = gate_b(1)

    # Classifier hidden padded to 128 lanes (zero cols), next layer gets zero rows.
    wc1 = jnp.pad(p["cls1_w"].T, ((0, 0), (0, 128 - 64)))        # (2H, 128)
    bc1 = jnp.pad(p["cls1_b"], (0, 128 - 64))                    # (128,)
    wc2 = jnp.pad(p["cls2_w"].T, ((0, 128 - 64), (0, CP - C)))   # (128, CP)
    bc2 = jnp.pad(p["cls2_b"], (0, CP - C))                      # (CP,)

    def pad_cols(w):
        return jnp.pad(w, ((0, 0), (0, WCOL - w.shape[1])))
    wblob = jnp.concatenate([pad_cols(w) for w in (w0, w1, wc1, wc2)],
                            axis=0).astype(jnp.bfloat16)         # (D+4H+128, 6H)

    def pad_row(b):
        return jnp.pad(b, (0, WCOL - b.shape[0]))
    brows = jnp.stack([pad_row(b) for b in (b0, b1, bc1, bc2)], axis=0)   # (4, 6H)
    bblob = jnp.pad(brows, ((0, 8 - brows.shape[0]), (0, 0)))             # (8, 6H) f32
    return wblob, bblob


# ---------------------------------------------------------------------------
# Pure-JAX reference (f32, PyTorch layout) for a correctness sanity check
# ---------------------------------------------------------------------------
def reference_forward(x, p, H):
    def cell(inp, w_ih, b_ih, b_hh):
        gates = inp @ w_ih.T + b_ih + b_hh
        i = jax.nn.sigmoid(gates[:, 0:H])
        g = jnp.tanh(gates[:, 2 * H:3 * H])
        o = jax.nn.sigmoid(gates[:, 3 * H:4 * H])
        return o * jnp.tanh(i * g)

    emb = x @ p["emb_w"].T + p["emb_b"]
    l0 = jnp.concatenate(
        [cell(emb, p["w_ih_l0_fwd"], p["b_ih_l0_fwd"], p["b_hh_l0_fwd"]),
         cell(emb, p["w_ih_l0_bwd"], p["b_ih_l0_bwd"], p["b_hh_l0_bwd"])], axis=1)
    hc = jnp.concatenate(
        [cell(l0, p["w_ih_l1_fwd"], p["b_ih_l1_fwd"], p["b_hh_l1_fwd"]),
         cell(l0, p["w_ih_l1_bwd"], p["b_ih_l1_bwd"], p["b_hh_l1_bwd"])], axis=1)
    z = jnp.maximum(hc @ p["cls1_w"].T + p["cls1_b"], 0.0)
    return z @ p["cls2_w"].T + p["cls2_b"]


# ---------------------------------------------------------------------------
if __name__ == "__main__":
    B, D, H, C = 2, 16, 64, 5          # hidden_dim=64 matches the module default
    key = jax.random.PRNGKey(0)
    k_x, k_p = jax.random.split(key)
    x = jax.random.normal(k_x, (B, D), jnp.float32)

    torch_params = init_torch_style_params(k_p, D, H, C)
    wblob, bblob = pack_params(torch_params, D, H, C)

    out = lstm_classifier_forward(x, wblob, bblob, D=D, H=H, C=C)
    out = jax.block_until_ready(out)

    assert out.shape == (B, C), out.shape
    assert bool(jnp.all(jnp.isfinite(out)))
    ref = reference_forward(x, torch_params, H)
    assert bool(jnp.allclose(out, ref, rtol=5e-2, atol=5e-2)), (out, ref)
    print("KERNEL_OK")
</pallas_src>

<mosaic_0001>
module attributes {stable_mosaic.version = 11 : i64} {
  func.func @lstm_classifier_kernel(%arg0: i32, %arg1: memref<8x16xbf16, #tpu.memory_space<vmem>>, %arg2: memref<400x384xbf16, #tpu.memory_space<vmem>>, %arg3: memref<8x384xf32, #tpu.memory_space<vmem>>, %arg4: memref<8x128xf32, #tpu.memory_space<vmem>>) attributes {dimension_semantics = [#tpu.dimension_semantics<parallel>], iteration_bounds = array<i64: 1>, scalar_prefetch = 0 : i64, scratch_operands = 0 : i64, tpu.core_type = #tpu.core_type<tc>, window_params = [{transform_indices = @transform_0, window_bounds = array<i64: 8, 16>}, {pipeline_mode = #tpu.pipeline_mode<synchronous>, transform_indices = @transform_1, window_bounds = array<i64: 400, 384>}, {pipeline_mode = #tpu.pipeline_mode<synchronous>, transform_indices = @transform_2, window_bounds = array<i64: 8, 384>}, {transform_indices = @transform_3, window_bounds = array<i64: 8, 128>}]} {
    %c0 = arith.constant 0 : index
    %c0_0 = arith.constant 0 : index
    %0 = vector.load %arg1[%c0, %c0_0] : memref<8x16xbf16, #tpu.memory_space<vmem>>, vector<8x16xbf16>
    %c0_1 = arith.constant 0 : index
    %c0_2 = arith.constant 0 : index
    %1 = vector.load %arg2[%c0_1, %c0_2] : memref<400x384xbf16, #tpu.memory_space<vmem>>, vector<16x384xbf16>
    %c0_3 = arith.constant 0 : index
    %c0_4 = arith.constant 0 : index
    %2 = vector.load %arg3[%c0_3, %c0_4] : memref<8x384xf32, #tpu.memory_space<vmem>>, vector<1x384xf32>
    %cst = arith.constant dense<0.000000e+00> : vector<8x384xf32>
    %3 = tpu.matmul %0, %1, %cst {dimension_numbers = #tpu.dot_dimension_numbers<[1], [0], [0], [1], [0, 0, 1, 1], [], []>} : vector<8x16xbf16>, vector<16x384xbf16>, vector<8x384xf32> -> vector<8x384xf32>
    %4 = vector.broadcast %2 : vector<1x384xf32> to vector<8x384xf32>
    %5 = arith.addf %3, %4 : vector<8x384xf32>
    %6 = vector.extract_strided_slice %5 {offsets = [0, 0], sizes = [8, 128], strides = [1, 1]} : vector<8x384xf32> to vector<8x128xf32>
    %7 = arith.negf %6 : vector<8x128xf32>
    %8 = math.exp %7 : vector<8x128xf32>
    %cst_5 = arith.constant 1.000000e+00 : f32
    %9 = vector.broadcast %cst_5 : f32 to vector<8x128xf32>
    %10 = arith.addf %9, %8 : vector<8x128xf32>
    %11 = arith.divf %9, %10 : vector<8x128xf32>
    %12 = vector.extract_strided_slice %5 {offsets = [0, 128], sizes = [8, 128], strides = [1, 1]} : vector<8x384xf32> to vector<8x128xf32>
    %13 = math.tanh %12 : vector<8x128xf32>
    %14 = vector.extract_strided_slice %5 {offsets = [0, 256], sizes = [8, 128], strides = [1, 1]} : vector<8x384xf32> to vector<8x128xf32>
    %15 = arith.negf %14 : vector<8x128xf32>
    %16 = math.exp %15 : vector<8x128xf32>
    %cst_6 = arith.constant 1.000000e+00 : f32
    %17 = vector.broadcast %cst_6 : f32 to vector<8x128xf32>
    %18 = arith.addf %17, %16 : vector<8x128xf32>
    %19 = arith.divf %17, %18 : vector<8x128xf32>
    %20 = arith.mulf %11, %13 : vector<8x128xf32>
    %21 = math.tanh %20 : vector<8x128xf32>
    %22 = arith.mulf %19, %21 : vector<8x128xf32>
    %23 = arith.truncf %22 : vector<8x128xf32> to vector<8x128xbf16>
    %c16 = arith.constant 16 : index
    %c0_7 = arith.constant 0 : index
    %24 = vector.load %arg2[%c16, %c0_7] : memref<400x384xbf16, #tpu.memory_space<vmem>>, vector<128x384xbf16>
    %c1 = arith.constant 1 : index
    %c0_8 = arith.constant 0 : index
    %25 = vector.load %arg3[%c1, %c0_8] : memref<8x384xf32, #tpu.memory_space<vmem>>, vector<1x384xf32>
    %cst_9 = arith.constant dense<0.000000e+00> : vector<8x384xf32>
    %26 = tpu.matmul %23, %24, %cst_9 {dimension_numbers = #tpu.dot_dimension_numbers<[1], [0], [0], [1], [0, 0, 1, 1], [], []>} : vector<8x128xbf16>, vector<128x384xbf16>, vector<8x384xf32> -> vector<8x384xf32>
    %27 = vector.broadcast %25 : vector<1x384xf32> to vector<8x384xf32>
    %28 = arith.addf %26, %27 : vector<8x384xf32>
    %29 = vector.extract_strided_slice %28 {offsets = [0, 0], sizes = [8, 128], strides = [1, 1]} : vector<8x384xf32> to vector<8x128xf32>
    %30 = arith.negf %29 : vector<8x128xf32>
    %31 = math.exp %30 : vector<8x128xf32>
    %cst_10 = arith.constant 1.000000e+00 : f32
    %32 = vector.broadcast %cst_10 : f32 to vector<8x128xf32>
    %33 = arith.addf %32, %31 : vector<8x128xf32>
    %34 = arith.divf %32, %33 : vector<8x128xf32>
    %35 = vector.extract_strided_slice %28 {offsets = [0, 128], sizes = [8, 128], strides = [1, 1]} : vector<8x384xf32> to vector<8x128xf32>
    %36 = math.tanh %35 : vector<8x128xf32>
    %37 = vector.extract_strided_slice %28 {offsets = [0, 256], sizes = [8, 128], strides = [1, 1]} : vector<8x384xf32> to vector<8x128xf32>
    %38 = arith.negf %37 : vector<8x128xf32>
    %39 = math.exp %38 : vector<8x128xf32>
    %cst_11 = arith.constant 1.000000e+00 : f32
    %40 = vector.broadcast %cst_11 : f32 to vector<8x128xf32>
    %41 = arith.addf %40, %39 : vector<8x128xf32>
    %42 = arith.divf %40, %41 : vector<8x128xf32>
    %43 = arith.mulf %34, %36 : vector<8x128xf32>
    %44 = math.tanh %43 : vector<8x128xf32>
    %45 = arith.mulf %42, %44 : vector<8x128xf32>
    %46 = arith.truncf %45 : vector<8x128xf32> to vector<8x128xbf16>
    %c144 = arith.constant 144 : index
    %c0_12 = arith.constant 0 : index
    %47 = vector.load %arg2[%c144, %c0_12] : memref<400x384xbf16, #tpu.memory_space<vmem>>, vector<128x128xbf16>
    %cst_13 = arith.constant dense<0.000000e+00> : vector<8x128xf32>
    %48 = tpu.matmul %46, %47, %cst_13 {dimension_numbers = #tpu.dot_dimension_numbers<[1], [0], [0], [1], [0, 0, 1, 1], [], []>} : vector<8x128xbf16>, vector<128x128xbf16>, vector<8x128xf32> -> vector<8x128xf32>
    %c2 = arith.constant 2 : index
    %c0_14 = arith.constant 0 : index
    %49 = vector.load %arg3[%c2, %c0_14] : memref<8x384xf32, #tpu.memory_space<vmem>>, vector<1x128xf32>
    %50 = vector.broadcast %49 : vector<1x128xf32> to vector<8x128xf32>
    %51 = arith.addf %48, %50 : vector<8x128xf32>
    %cst_15 = arith.constant 0.000000e+00 : f32
    %52 = vector.broadcast %cst_15 : f32 to vector<8x128xf32>
    %53 = arith.maximumf %51, %52 : vector<8x128xf32>
    %54 = arith.truncf %53 : vector<8x128xf32> to vector<8x128xbf16>
    %c272 = arith.constant 272 : index
    %c0_16 = arith.constant 0 : index
    %55 = vector.load %arg2[%c272, %c0_16] : memref<400x384xbf16, #tpu.memory_space<vmem>>, vector<128x128xbf16>
    %cst_17 = arith.constant dense<0.000000e+00> : vector<8x128xf32>
    %56 = tpu.matmul %54, %55, %cst_17 {dimension_numbers = #tpu.dot_dimension_numbers<[1], [0], [0], [1], [0, 0, 1, 1], [], []>} : vector<8x128xbf16>, vector<128x128xbf16>, vector<8x128xf32> -> vector<8x128xf32>
    %c3 = arith.constant 3 : index
    %c0_18 = arith.constant 0 : index
    %57 = vector.load %arg3[%c3, %c0_18] : memref<8x384xf32, #tpu.memory_space<vmem>>, vector<1x128xf32>
    %58 = vector.broadcast %57 : vector<1x128xf32> to vector<8x128xf32>
    %59 = arith.addf %56, %58 : vector<8x128xf32>
    %c0_19 = arith.constant 0 : index
    %c0_20 = arith.constant 0 : index
    %60 = vector.load %arg4[%c0_19, %c0_20] : memref<8x128xf32, #tpu.memory_space<vmem>>, vector<8x128xf32>
    tpu.vector_store %arg4[%c0_19, %c0_20], %59 {strides = array<i32>} : memref<8x128xf32, #tpu.memory_space<vmem>>, vector<8x128xf32>,
    return
  }
  func.func @transform_0(%arg0: i32) -> (i32, i32) {
    %c0_i32 = arith.constant 0 : i32
    %c0_i32_0 = arith.constant 0 : i32
    return %arg0, %c0_i32 : i32, i32
  }
  func.func @transform_1(%arg0: i32) -> (i32, i32) {
    %c0_i32 = arith.constant 0 : i32
    %c0_i32_0 = arith.constant 0 : i32
    %c0_i32_1 = arith.constant 0 : i32
    return %c0_i32, %c0_i32_0 : i32, i32
  }
  func.func @transform_2(%arg0: i32) -> (i32, i32) {
    %c0_i32 = arith.constant 0 : i32
    %c0_i32_0 = arith.constant 0 : i32
    %c0_i32_1 = arith.constant 0 : i32
    return %c0_i32, %c0_i32_0 : i32, i32
  }
  func.func @transform_3(%arg0: i32) -> (i32, i32) {
    %c0_i32 = arith.constant 0 : i32
    %c0_i32_0 = arith.constant 0 : i32
    return %arg0, %c0_i32 : i32, i32
  }
}

</mosaic_0001>

<llo_original>
// kernel: lstm_classifier_forward.1
$region0: #{lstm_classifier_forward.1}
  #allocation0 [shape = 'u32[]', space=smem, size = 0x4, offset = 0x4, fixed_abs, tag = 'smem constant byte address 0x4 - core index']
  #allocation1 [shape = 'u32[72,128]{1,0:T(1,128)}', space=vmem, size = 0x9000, scoped, tag = 'internal scratch']
  %s0 = inlined_call_operand.vmem [shape: bf16[8,16], index: 0, kind: input, shape index: {}]
  %s1 = inlined_call_operand.hbm [shape: bf16[400,384], index: 1, kind: input, shape index: {}]
  %s2 = inlined_call_operand.hbm [shape: f32[8,384], index: 2, kind: input, shape index: {}]
  %s3 = inlined_call_operand.vmem [shape: f32[8,128], index: 3, kind: output, shape index: {}]
  %s4 = sld [smem:[#allocation0]]
  $region30: #{lstm_classifier_forward.1} parent=0
    _
  %s6 = ssub.s32 1, %s4
  %s7 = scalar_select 0, %s6, %s4
  $region1: #{lstm_classifier_forward.1} parent=0
    #allocation2 [shape = 'u8[307200]{0}', space=vmem, size = 0x4b000, scoped, tag = 'input window, operand 1, single buffered']
    #allocation3 [shape = 's32[1]{0}', space=sflag, size = 0x4, scoped, tag = 'scoped memory for lstm_classifier_forward.1']
    #allocation4 [shape = 'u8[12288]{0}', space=vmem, size = 0x3000, scoped, tag = 'input window, operand 2, single buffered']
    #allocation5 [shape = 's32[1]{0}', space=sflag, size = 0x4, scoped, tag = 'scoped memory for lstm_classifier_forward.1']
    %8 = vsyncpa [#allocation3], 0
    %9 = vsyncpa [#allocation5], 0
    // Predicated region
    $region2: #{lstm_classifier_forward.1} parent=1 // pred_check
      _
    $region3: #{lstm_classifier_forward.1} parent=1 // pred_check_branch
      %11 = sbr.rel (0) target = $region5
    $region4: #{lstm_classifier_forward.1} parent=1 // pred_region
      _
    $region5: #{lstm_classifier_forward.1} parent=1 // pred_fallthru
      _
    // Predicated region
    $region6: #{lstm_classifier_forward.1} parent=1 // pred_check
      _
    $region7: #{lstm_classifier_forward.1} parent=1 // pred_check_branch
      %13 = sbr.rel (0) target = $region9
    $region8: #{lstm_classifier_forward.1} parent=1 // pred_region
      %15 = vsyncadd [#allocation3], 0
      %s16 = sshll.u32 %s1, 4
      %s17 = int_to_ptr.hbm [resolvable:$true] %s16
      %s18 = sshll.u32 [#allocation2], 4
      %s19 = int_to_ptr.vmem [resolvable:$true] %s18
      %24 = dma.hbm_to_vmem [thread:$0]  %s17, 9600, %s19, [#allocation3], 192, 192, 12
    $region9: #{lstm_classifier_forward.1} parent=1 // pred_fallthru
      _
    // Predicated region
    $region10: #{lstm_classifier_forward.1} parent=1 // pred_check
      _
    $region11: #{lstm_classifier_forward.1} parent=1 // pred_check_branch
      %26 = sbr.rel (0) target = $region13
    $region12: #{lstm_classifier_forward.1} parent=1 // pred_region
      %28 = vsyncadd [#allocation5], 0
      %s30 = sshll.u32 %s2, 4
      %s31 = int_to_ptr.hbm [resolvable:$true] %s30
      %s32 = sshll.u32 [#allocation4], 4
      %s33 = int_to_ptr.vmem [resolvable:$true] %s32
      %35 = dma.hbm_to_vmem [thread:$0]  %s31, 384, %s33, [#allocation5]
    $region13: #{lstm_classifier_forward.1} parent=1 // pred_fallthru
      _
    // Predicated region
    $region14: #{lstm_classifier_forward.1} parent=1 // pred_check
      _
    $region15: #{lstm_classifier_forward.1} parent=1 // pred_check_branch
      %37 = sbr.rel (0) target = $region17
    $region16: #{lstm_classifier_forward.1} parent=1 // pred_region
      %39 = dma.done [#allocation3], 9600
    $region17: #{lstm_classifier_forward.1} parent=1 // pred_fallthru
      _
    // Predicated region
    $region18: #{lstm_classifier_forward.1} parent=1 // pred_check
      _
    $region19: #{lstm_classifier_forward.1} parent=1 // pred_check_branch
      %41 = sbr.rel (0) target = $region21
    $region20: #{lstm_classifier_forward.1} parent=1 // pred_region
      %43 = dma.done [#allocation5], 384
    $region21: #{lstm_classifier_forward.1} parent=1 // pred_fallthru
      _
    %v45 = vld [vmem:[%s0] sm:$0xf]
    %v46 = vld [vmem:[#allocation2] sm:$0xff]
    %v47 = vld [vmem:[#allocation2 + $0x8] sm:$0xf]
    %v48 = vld [vmem:[#allocation2 + $0xc] sm:$0xff]
    %v49 = vld [vmem:[#allocation2 + $0x14] sm:$0xf]
    %v50 = vld [vmem:[#allocation4] ss:$8 sm:$0x7]
    %v52 = vperm.slane %v50, 0
    %v53 = vperm.slane %v50, 1
    %v54 = vperm.slane %v50, 2
    %v62 = vunpack.c.l.b16 %v46
    %v63 = vunpack.c.h.b16 %v46
    %v64 = vunpack.c.l.b16 %v47
    %v65 = vunpack.c.l.b16 %v48
    %v66 = vunpack.c.h.b16 %v48
    %v67 = vunpack.c.l.b16 %v49
    %v68 = vpack.c.b16 %v65, %v62
    %v69 = vpack.c.b16 %v66, %v63
    %v70 = vpack.c.b16 %v67, %v64
    %vm74 = vcmask 130048
    %v76 = vsel %vm74, %v45, 0
    %78 = vmatpush.bf16.msra.mxu0 0
    %79 = vmatpush.bf16.msra.mxu0 0
    %80 = vmatpush.bf16.msra.mxu0 0
    %81 = vmatpush.bf16.msra.mxu0 0
    %82 = vmatpush.bf16.msra.mxu0 0
    %83 = vmatpush.bf16.msra.mxu0 0
    %84 = vmatpush.bf16.msra.mxu0 0
    %85 = vmatpush.bf16.msra.mxu0 %v68
    %86 = vmatmul.bf16.gmra.mxu0 %v76
    %v87 = vpop.f32.mrf.mxu0
    %v88 = vadd.f32 %v52, %v87
    %v89 = vpop.f32.mrf.mxu0
    %90 = vdwg.mxu0
    %91 = vmatpush.bf16.msra.mxu0 0
    %92 = vmatpush.bf16.msra.mxu0 0
    %93 = vmatpush.bf16.msra.mxu0 0
    %94 = vmatpush.bf16.msra.mxu0 0
    %95 = vmatpush.bf16.msra.mxu0 0
    %96 = vmatpush.bf16.msra.mxu0 0
    %97 = vmatpush.bf16.msra.mxu0 0
    %98 = vmatpush.bf16.msra.mxu0 %v69
    %99 = vmatmul.bf16.gmra.mxu0 %v76
    %v100 = vpop.f32.mrf.mxu0
    %v101 = vadd.f32 %v53, %v100
    %v102 = vpop.f32.mrf.mxu0
    %103 = vdwg.mxu0
    %104 = vmatpush.bf16.msra.mxu0 0
    %105 = vmatpush.bf16.msra.mxu0 0
    %106 = vmatpush.bf16.msra.mxu0 0
    %107 = vmatpush.bf16.msra.mxu0 0
    %108 = vmatpush.bf16.msra.mxu0 0
    %109 = vmatpush.bf16.msra.mxu0 0
    %110 = vmatpush.bf16.msra.mxu0 0
    %111 = vmatpush.bf16.msra.mxu0 %v70
    %112 = vmatmul.bf16.gmra.mxu0 %v76
    %v113 = vpop.f32.mrf.mxu0
    %v114 = vadd.f32 %v54, %v113
    %v115 = vpop.f32.mrf.mxu0
    %116 = vdwg.mxu0
    %v117 = vxor.u32 %v88, 2147483648
    %v118 = vmul.f32 %v117, 1.442695
    %v119 = vpow.pop %v118
    %v120 = vadd.f32 %v119, 1.0
    %v121 = vrcp.pop %v120
    %v122 = vmul.f32 %v120, %v121
    %v123 = vsub.f32 1.0, %v122
    %v124 = vmul.f32 %v121, %v123
    %v125 = vadd.f32 %v121, %v124
    %vm126 = vweird.f32 %v120
    %vm127 = vweird.f32 %v121
    %vm128 = vmor %vm126, %vm127
    %v129 = vsel %vm128, %v121, %v125
    %v130 = vand.u32 2147483647, %v120
    %vm131 = vcmp.eq.f32.partialorder %v130, 8.507059e+37
    %v132 = vand.u32 %v120, 2147483648
    %v133 = vor.u32 1.1754944e-38, %v132
    %v134 = vsel %vm131, %v133, %v129
    %v135 = vmul.f32 1.0, %v134
    %v136 = vtanh.pop %v101
    %v137 = vxor.u32 %v114, 2147483648
    %v138 = vmul.f32 %v137, 1.442695
    %v139 = vpow.pop %v138
    %v140 = vadd.f32 %v139, 1.0
    %v141 = vrcp.pop %v140
    %v142 = vmul.f32 %v140, %v141
    %v143 = vsub.f32 1.0, %v142
    %v144 = vmul.f32 %v141, %v143
    %v145 = vadd.f32 %v141, %v144
    %vm146 = vweird.f32 %v140
    %vm147 = vweird.f32 %v141
    %vm148 = vmor %vm146, %vm147
    %v149 = vsel %vm148, %v141, %v145
    %v150 = vand.u32 2147483647, %v140
    %vm151 = vcmp.eq.f32.partialorder %v150, 8.507059e+37
    %v152 = vand.u32 %v140, 2147483648
    %v153 = vor.u32 1.1754944e-38, %v152
    %v154 = vsel %vm151, %v153, %v149
    %v155 = vmul.f32 1.0, %v154
    %v156 = vmul.f32 %v135, %v136
    %v157 = vtanh.pop %v156
    %v158 = vmul.f32 %v155, %v157
    %v159 = vpack.c.bf16 %v158, %v158
    %v160 = vld [vmem:[#allocation2 + $0x18] sm:$0xff]
    %v161 = vld [vmem:[#allocation2 + $0x20] sm:$0xf]
    %v162 = vld [vmem:[#allocation2 + $0x24] sm:$0xff]
    %v163 = vld [vmem:[#allocation2 + $0x2c] sm:$0xf]
    %v164 = vld [vmem:[#allocation2 + $0x30] sm:$0xff]
    %v165 = vld [vmem:[#allocation2 + $0x38] sm:$0xf]
    %v166 = vld [vmem:[#allocation2 + $0x3c] sm:$0xff]
    %v167 = vld [vmem:[#allocation2 + $0x44] sm:$0xf]
    %v168 = vld [vmem:[#allocation2 + $0x48] sm:$0xff]
    %v169 = vld [vmem:[#allocation2 + $0x50] sm:$0xf]
    %v170 = vld [vmem:[#allocation2 + $0x54] sm:$0xff]
    %v171 = vld [vmem:[#allocation2 + $0x5c] sm:$0xf]
    %v172 = vld [vmem:[#allocation2 + $0x60] sm:$0xff]
    %v173 = vld [vmem:[#allocation2 + $0x68] sm:$0xf]
    %v174 = vld [vmem:[#allocation2 + $0x6c] sm:$0xff]
    %v175 = vld [vmem:[#allocation2 + $0x74] sm:$0xf]
    %v176 = vld [vmem:[#allocation2 + $0x78] sm:$0xff]
    %v177 = vld [vmem:[#allocation2 + $0x80] sm:$0xf]
    %v178 = vld [vmem:[#allocation2 + $0x84] sm:$0xff]
    %v179 = vld [vmem:[#allocation2 + $0x8c] sm:$0xf]
    %v180 = vld [vmem:[#allocation2 + $0x90] sm:$0xff]
    %v181 = vld [vmem:[#allocation2 + $0x98] sm:$0xf]
    %v182 = vld [vmem:[#allocation2 + $0x9c] sm:$0xff]
    %v183 = vld [vmem:[#allocation2 + $0xa4] sm:$0xf]
    %v184 = vld [vmem:[#allocation2 + $0xa8] sm:$0xff]
    %v185 = vld [vmem:[#allocation2 + $0xb0] sm:$0xf]
    %v186 = vld [vmem:[#allocation2 + $0xb4] sm:$0xff]
    %v187 = vld [vmem:[#allocation2 + $0xbc] sm:$0xf]
    %v188 = vld [vmem:[#allocation2 + $0xc0] sm:$0xff]
    %v189 = vld [vmem:[#allocation2 + $0xc8] sm:$0xf]
    %v190 = vld [vmem:[#allocation2 + $0xcc] sm:$0xff]
    %v191 = vld [vmem:[#allocation2 + $0xd4] sm:$0xf]
    %s192 = scalar_lea.vmem [#allocation4], 1
    %v193 = vld [vmem:[%s192] ss:$8 sm:$0x7]
    %v195 = vperm.slane %v193, 0
    %v196 = vperm.slane %v193, 1
    %v197 = vperm.slane %v193, 2
    %v233 = vunpack.c.l.b16 %v160
    %v234 = vunpack.c.h.b16 %v160
    %v235 = vunpack.c.l.b16 %v161
    %v236 = vunpack.c.l.b16 %v162
    %v237 = vunpack.c.h.b16 %v162
    %v238 = vunpack.c.l.b16 %v163
    %v239 = vunpack.c.l.b16 %v164
    %v240 = vunpack.c.h.b16 %v164
    %v241 = vunpack.c.l.b16 %v165
    %v242 = vunpack.c.l.b16 %v166
    %v243 = vunpack.c.h.b16 %v166
    %v244 = vunpack.c.l.b16 %v167
    %v245 = vunpack.c.l.b16 %v168
    %v246 = vunpack.c.h.b16 %v168
    %v247 = vunpack.c.l.b16 %v169
    %v248 = vunpack.c.l.b16 %v170
    %v249 = vunpack.c.h.b16 %v170
    %v250 = vunpack.c.l.b16 %v171
    %v251 = vunpack.c.l.b16 %v172
    %v252 = vunpack.c.h.b16 %v172
    %v253 = vunpack.c.l.b16 %v173
    %v254 = vunpack.c.l.b16 %v174
    %v255 = vunpack.c.h.b16 %v174
    %v256 = vunpack.c.l.b16 %v175
    %v257 = vunpack.c.l.b16 %v176
    %v258 = vunpack.c.h.b16 %v176
    %v259 = vunpack.c.l.b16 %v177
    %v260 = vunpack.c.l.b16 %v178
    %v261 = vunpack.c.h.b16 %v178
    %v262 = vunpack.c.l.b16 %v179
    %v263 = vunpack.c.l.b16 %v180
    %v264 = vunpack.c.h.b16 %v180
    %v265 = vunpack.c.l.b16 %v181
    %v266 = vunpack.c.l.b16 %v182
    %v267 = vunpack.c.h.b16 %v182
    %v268 = vunpack.c.l.b16 %v183
    %v269 = vunpack.c.l.b16 %v184
    %v270 = vunpack.c.h.b16 %v184
    %v271 = vunpack.c.l.b16 %v185
    %v272 = vunpack.c.l.b16 %v186
    %v273 = vunpack.c.h.b16 %v186
    %v274 = vunpack.c.l.b16 %v187
    %v275 = vunpack.c.l.b16 %v188
    %v276 = vunpack.c.h.b16 %v188
    %v277 = vunpack.c.l.b16 %v189
    %v278 = vunpack.c.l.b16 %v190
    %v279 = vunpack.c.h.b16 %v190
    %v280 = vunpack.c.l.b16 %v191
    %v281 = vpack.c.b16 %v236, %v233
    %v282 = vpack.c.b16 %v237, %v234
    %v283 = vpack.c.b16 %v238, %v235
    %v284 = vpack.c.b16 %v242, %v239
    %v285 = vpack.c.b16 %v243, %v240
    %v286 = vpack.c.b16 %v244, %v241
    %v287 = vpack.c.b16 %v248, %v245
    %v288 = vpack.c.b16 %v249, %v246
    %v289 = vpack.c.b16 %v250, %v247
    %v290 = vpack.c.b16 %v254, %v251
    %v291 = vpack.c.b16 %v255, %v252
    %v292 = vpack.c.b16 %v256, %v253
    %v293 = vpack.c.b16 %v260, %v257
    %v294 = vpack.c.b16 %v261, %v258
    %v295 = vpack.c.b16 %v262, %v259
    %v296 = vpack.c.b16 %v266, %v263
    %v297 = vpack.c.b16 %v267, %v264
    %v298 = vpack.c.b16 %v268, %v265
    %v299 = vpack.c.b16 %v272, %v269
    %v300 = vpack.c.b16 %v273, %v270
    %v301 = vpack.c.b16 %v274, %v271
    %v302 = vpack.c.b16 %v278, %v275
    %v303 = vpack.c.b16 %v279, %v276
    %v304 = vpack.c.b16 %v280, %v277
    %329 = vmatpush.bf16.msra.mxu0 %v302
    %330 = vmatpush.bf16.msra.mxu0 %v299
    %331 = vmatpush.bf16.msra.mxu0 %v296
    %332 = vmatpush.bf16.msra.mxu0 %v293
    %333 = vmatpush.bf16.msra.mxu0 %v290
    %334 = vmatpush.bf16.msra.mxu0 %v287
    %335 = vmatpush.bf16.msra.mxu0 %v284
    %336 = vmatpush.bf16.msra.mxu0 %v281
    %337 = vmatmul.bf16.gmra.mxu0 %v159
    %v338 = vpop.f32.mrf.mxu0
    %v339 = vadd.f32 %v195, %v338
    %v340 = vpop.f32.mrf.mxu0
    %341 = vdwg.mxu0
    %342 = vmatpush.bf16.msra.mxu0 %v303
    %343 = vmatpush.bf16.msra.mxu0 %v300
    %344 = vmatpush.bf16.msra.mxu0 %v297
    %345 = vmatpush.bf16.msra.mxu0 %v294
    %346 = vmatpush.bf16.msra.mxu0 %v291
    %347 = vmatpush.bf16.msra.mxu0 %v288
    %348 = vmatpush.bf16.msra.mxu0 %v285
    %349 = vmatpush.bf16.msra.mxu0 %v282
    %350 = vmatmul.bf16.gmra.mxu0 %v159
    %v351 = vpop.f32.mrf.mxu0
    %v352 = vadd.f32 %v196, %v351
    %v353 = vpop.f32.mrf.mxu0
    %354 = vdwg.mxu0
    %355 = vmatpush.bf16.msra.mxu0 %v304
    %356 = vmatpush.bf16.msra.mxu0 %v301
    %357 = vmatpush.bf16.msra.mxu0 %v298
    %358 = vmatpush.bf16.msra.mxu0 %v295
    %359 = vmatpush.bf16.msra.mxu0 %v292
    %360 = vmatpush.bf16.msra.mxu0 %v289
    %361 = vmatpush.bf16.msra.mxu0 %v286
    %362 = vmatpush.bf16.msra.mxu0 %v283
    %363 = vmatmul.bf16.gmra.mxu0 %v159
    %v364 = vpop.f32.mrf.mxu0
    %v365 = vadd.f32 %v197, %v364
    %v366 = vpop.f32.mrf.mxu0
    %367 = vdwg.mxu0
    %v368 = vxor.u32 %v339, 2147483648
    %v369 = vmul.f32 %v368, 1.442695
    %v370 = vpow.pop %v369
    %v371 = vadd.f32 %v370, 1.0
    %v372 = vrcp.pop %v371
    %v373 = vmul.f32 %v371, %v372
    %v374 = vsub.f32 1.0, %v373
    %v375 = vmul.f32 %v372, %v374
    %v376 = vadd.f32 %v372, %v375
    %vm377 = vweird.f32 %v371
    %vm378 = vweird.f32 %v372
    %vm379 = vmor %vm377, %vm378
    %v380 = vsel %vm379, %v372, %v376
    %v381 = vand.u32 2147483647, %v371
    %vm382 = vcmp.eq.f32.partialorder %v381, 8.507059e+37
    %v383 = vand.u32 %v371, 2147483648
    %v384 = vor.u32 1.1754944e-38, %v383
    %v385 = vsel %vm382, %v384, %v380
    %v386 = vmul.f32 1.0, %v385
    %v387 = vtanh.pop %v352
    %v388 = vxor.u32 %v365, 2147483648
    %v389 = vmul.f32 %v388, 1.442695
    %v390 = vpow.pop %v389
    %v391 = vadd.f32 %v390, 1.0
    %v392 = vrcp.pop %v391
    %v393 = vmul.f32 %v391, %v392
    %v394 = vsub.f32 1.0, %v393
    %v395 = vmul.f32 %v392, %v394
    %v396 = vadd.f32 %v392, %v395
    %vm397 = vweird.f32 %v391
    %vm398 = vweird.f32 %v392
    %vm399 = vmor %vm397, %vm398
    %v400 = vsel %vm399, %v392, %v396
    %v401 = vand.u32 2147483647, %v391
    %vm402 = vcmp.eq.f32.partialorder %v401, 8.507059e+37
    %v403 = vand.u32 %v391, 2147483648
    %v404 = vor.u32 1.1754944e-38, %v403
    %v405 = vsel %vm402, %v404, %v400
    %v406 = vmul.f32 1.0, %v405
    %v407 = vmul.f32 %v386, %v387
    %v408 = vtanh.pop %v407
    %v409 = vmul.f32 %v406, %v408
    %v410 = vpack.c.bf16 %v409, %v409
    %v411 = vld [vmem:[#allocation2 + $0xd8] sm:$0xf]
    %v412 = vld [vmem:[#allocation2 + $0xe4] sm:$0xf]
    %v413 = vld [vmem:[#allocation2 + $0xf0] sm:$0xf]
    %v414 = vld [vmem:[#allocation2 + $0xfc] sm:$0xf]
    %v415 = vld [vmem:[#allocation2 + $0x108] sm:$0xf]
    %v416 = vld [vmem:[#allocation2 + $0x114] sm:$0xf]
    %v417 = vld [vmem:[#allocation2 + $0x120] sm:$0xf]
    %v418 = vld [vmem:[#allocation2 + $0x12c] sm:$0xf]
    %v419 = vld [vmem:[#allocation2 + $0x138] sm:$0xf]
    %v420 = vld [vmem:[#allocation2 + $0x144] sm:$0xf]
    %v421 = vld [vmem:[#allocation2 + $0x150] sm:$0xf]
    %v422 = vld [vmem:[#allocation2 + $0x15c] sm:$0xf]
    %v423 = vld [vmem:[#allocation2 + $0x168] sm:$0xf]
    %v424 = vld [vmem:[#allocation2 + $0x174] sm:$0xf]
    %v425 = vld [vmem:[#allocation2 + $0x180] sm:$0xf]
    %v426 = vld [vmem:[#allocation2 + $0x18c] sm:$0xf]
    %v427 = vld [vmem:[#allocation4 + $0x2] ss:$0 sm:$0xff]
    %v444 = vunpack.c.l.b16 %v411
    %v445 = vunpack.c.l.b16 %v412
    %v446 = vunpack.c.l.b16 %v413
    %v447 = vunpack.c.l.b16 %v414
    %v448 = vunpack.c.l.b16 %v415
    %v449 = vunpack.c.l.b16 %v416
    %v450 = vunpack.c.l.b16 %v417
    %v451 = vunpack.c.l.b16 %v418
    %v452 = vunpack.c.l.b16 %v419
    %v453 = vunpack.c.l.b16 %v420
    %v454 = vunpack.c.l.b16 %v421
    %v455 = vunpack.c.l.b16 %v422
    %v456 = vunpack.c.l.b16 %v423
    %v457 = vunpack.c.l.b16 %v424
    %v458 = vunpack.c.l.b16 %v425
    %v459 = vunpack.c.l.b16 %v426
    %v460 = vpack.c.b16 %v445, %v444
    %v461 = vpack.c.b16 %v447, %v446
    %v462 = vpack.c.b16 %v449, %v448
    %v463 = vpack.c.b16 %v451, %v450
    %v464 = vpack.c.b16 %v453, %v452
    %v465 = vpack.c.b16 %v455, %v454
    %v466 = vpack.c.b16 %v457, %v456
    %v467 = vpack.c.b16 %v459, %v458
    %476 = vmatpush.bf16.msra.mxu0 %v467
    %477 = vmatpush.bf16.msra.mxu0 %v466
    %478 = vmatpush.bf16.msra.mxu0 %v465
    %479 = vmatpush.bf16.msra.mxu0 %v464
    %480 = vmatpush.bf16.msra.mxu0 %v463
    %481 = vmatpush.bf16.msra.mxu0 %v462
    %482 = vmatpush.bf16.msra.mxu0 %v461
    %483 = vmatpush.bf16.msra.mxu0 %v460
    %484 = vmatmul.bf16.gmra.mxu0 %v410
    %v485 = vpop.f32.mrf.mxu0
    %v486 = vadd.f32 %v427, %v485
    %v487 = vpop.f32.mrf.mxu0
    %488 = vdwg.mxu0
    %v489 = vmax.f32 %v486, 0.0
    %v490 = vpack.c.bf16 %v489, %v489
    %v491 = vld [vmem:[#allocation2 + $0x198] sm:$0xf]
    %v492 = vld [vmem:[#allocation2 + $0x1a4] sm:$0xf]
    %v493 = vld [vmem:[#allocation2 + $0x1b0] sm:$0xf]
    %v494 = vld [vmem:[#allocation2 + $0x1bc] sm:$0xf]
    %v495 = vld [vmem:[#allocation2 + $0x1c8] sm:$0xf]
    %v496 = vld [vmem:[#allocation2 + $0x1d4] sm:$0xf]
    %v497 = vld [vmem:[#allocation2 + $0x1e0] sm:$0xf]
    %v498 = vld [vmem:[#allocation2 + $0x1ec] sm:$0xf]
    %v499 = vld [vmem:[#allocation2 + $0x1f8] sm:$0xf]
    %v500 = vld [vmem:[#allocation2 + $0x204] sm:$0xf]
    %v501 = vld [vmem:[#allocation2 + $0x210] sm:$0xf]
    %v502 = vld [vmem:[#allocation2 + $0x21c] sm:$0xf]
    %v503 = vld [vmem:[#allocation2 + $0x228] sm:$0xf]
    %v504 = vld [vmem:[#allocation2 + $0x234] sm:$0xf]
    %v505 = vld [vmem:[#allocation2 + $0x240] sm:$0xf]
    %v506 = vld [vmem:[#allocation2 + $0x24c] sm:$0xf]
    %v507 = vld [vmem:[#allocation4 + $0x3] ss:$0 sm:$0xff]
    %v524 = vunpack.c.l.b16 %v491
    %v525 = vunpack.c.l.b16 %v492
    %v526 = vunpack.c.l.b16 %v493
    %v527 = vunpack.c.l.b16 %v494
    %v528 = vunpack.c.l.b16 %v495
    %v529 = vunpack.c.l.b16 %v496
    %v530 = vunpack.c.l.b16 %v497
    %v531 = vunpack.c.l.b16 %v498
    %v532 = vunpack.c.l.b16 %v499
    %v533 = vunpack.c.l.b16 %v500
    %v534 = vunpack.c.l.b16 %v501
    %v535 = vunpack.c.l.b16 %v502
    %v536 = vunpack.c.l.b16 %v503
    %v537 = vunpack.c.l.b16 %v504
    %v538 = vunpack.c.l.b16 %v505
    %v539 = vunpack.c.l.b16 %v506
    %v540 = vpack.c.b16 %v525, %v524
    %v541 = vpack.c.b16 %v527, %v526
    %v542 = vpack.c.b16 %v529, %v528
    %v543 = vpack.c.b16 %v531, %v530
    %v544 = vpack.c.b16 %v533, %v532
    %v545 = vpack.c.b16 %v535, %v534
    %v546 = vpack.c.b16 %v537, %v536
    %v547 = vpack.c.b16 %v539, %v538
    %556 = vmatpush.bf16.msra.mxu0 %v547
    %557 = vmatpush.bf16.msra.mxu0 %v546
    %558 = vmatpush.bf16.msra.mxu0 %v545
    %559 = vmatpush.bf16.msra.mxu0 %v544
    %560 = vmatpush.bf16.msra.mxu0 %v543
    %561 = vmatpush.bf16.msra.mxu0 %v542
    %562 = vmatpush.bf16.msra.mxu0 %v541
    %563 = vmatpush.bf16.msra.mxu0 %v540
    %564 = vmatmul.bf16.gmra.mxu0 %v490
    %v565 = vpop.f32.mrf.mxu0
    %v566 = vadd.f32 %v507, %v565
    %v567 = vpop.f32.mrf.mxu0
    %568 = vdwg.mxu0
    %569 = vst [vmem:[%s3] sm:$0xff] %v566
    // Predicated region
    $region22: #{lstm_classifier_forward.1} parent=1 // pred_check
      _
    $region23: #{lstm_classifier_forward.1} parent=1 // pred_check_branch
      %571 = sbr.rel (0) target = $region25
    $region24: #{lstm_classifier_forward.1} parent=1 // pred_region
      _
    $region25: #{lstm_classifier_forward.1} parent=1 // pred_fallthru
      _
    // Predicated region
    $region26: #{lstm_classifier_forward.1} parent=1 // pred_check
      _
    $region27: #{lstm_classifier_forward.1} parent=1 // pred_check_branch
      %573 = sbr.rel (0) target = $region29
    $region28: #{lstm_classifier_forward.1} parent=1 // pred_region
      _
    $region29: #{lstm_classifier_forward.1} parent=1 // pred_fallthru
      _
    %574 = vsyncpa [#allocation3], 1
    %575 = vsyncpa [#allocation5], 1

</llo_original>
